<compile_context>
chip_gen: v7x
topology: tpu7x:2x2x1
jax: 0.10.0
libtpu: 0.0.40
codegen_flags: <defaults>
</compile_context>

<pallas_src>
import functools

import jax
import jax.numpy as jnp
from jax import lax
from jax.experimental import pallas as pl
from jax.experimental.pallas import tpu as pltpu


def _round_up(x, m):
    return ((x + m - 1) // m) * m


def qvalue_kernel(x_ref, w1_ref, b1_ref, wh_ref, bh_ref, wo_ref, bo_ref,
                  out_ref, *, num_hidden_repeats):
    # First linear: (TB, IN_PAD) @ (IN_PAD, H_PAD) + (1, H_PAD), f32 accumulate.
    h = jnp.dot(x_ref[...], w1_ref[...],
                preferred_element_type=jnp.float32) + b1_ref[...]

    # (layer_size - 1) repeats of the SAME shared ReLU + Linear block.
    wh = wh_ref[...]   # hoisted: stays resident across the loop
    bh = bh_ref[...]

    def body(_, h):
        a = jnp.maximum(h, 0.0).astype(wh.dtype)
        return jnp.dot(a, wh, preferred_element_type=jnp.float32) + bh

    h = lax.fori_loop(0, num_hidden_repeats, body, h, unroll=True)

    # Output head: (1, H_PAD) contracted with (TB, H_PAD) on the last axis of
    # both -> (1, TB).  Lane-dense result row; avoids the N=1 skinny matmul
    # drain and masked 1-lane output stores.
    q = lax.dot_general(wo_ref[...], h.astype(wo_ref.dtype),
                        dimension_numbers=(((1,), (1,)), ((), ())),
                        preferred_element_type=jnp.float32)
    out_ref[...] = (q + bo_ref[...]).astype(out_ref.dtype)


def qvalue_forward(state, action, params, *, layer_size, block_batch=256,
                   compute_dtype=jnp.float32):
    """state: (B, obs_dim), action: (B, action_dim) float32.

    params: weights stored as (in, out) = PyTorch W.T; biases as (1, out)."""
    B, obs_dim = state.shape
    act_dim = action.shape[1]
    in_dim = obs_dim + act_dim
    hidden = params["wh"].shape[0]

    in_pad = _round_up(in_dim, 128)
    h_pad = _round_up(hidden, 128)

    # Batch tiling: single tile for small batches, 256-row tiles otherwise.
    b_r = _round_up(B, 8)
    if b_r <= block_batch:
        tb, b_pad = b_r, b_r
    else:
        tb = block_batch
        b_pad = _round_up(B, block_batch)
    grid = (b_pad // tb,)

    # --- wrapper-side layout prep (pure plumbing, fused by XLA) ---
    x = jnp.concatenate([state, action], axis=-1)
    x = jnp.pad(x, ((0, b_pad - B), (0, in_pad - in_dim))).astype(compute_dtype)

    w1 = jnp.pad(params["w1"], ((0, in_pad - in_dim), (0, h_pad - hidden))).astype(compute_dtype)
    b1 = jnp.pad(params["b1"], ((0, 0), (0, h_pad - hidden))).astype(jnp.float32)
    wh = jnp.pad(params["wh"], ((0, h_pad - hidden), (0, h_pad - hidden))).astype(compute_dtype)
    bh = jnp.pad(params["bh"], ((0, 0), (0, h_pad - hidden))).astype(jnp.float32)
    wo = jnp.pad(params["wo"].T, ((0, 0), (0, h_pad - hidden))).astype(compute_dtype)  # (1, H_PAD)
    bo = params["bo"].astype(jnp.float32)                                              # (1, 1)

    num_repeats = layer_size - 1
    itemsize = jnp.dtype(compute_dtype).itemsize
    flops = 2 * b_pad * (in_pad * h_pad + num_repeats * h_pad * h_pad + h_pad)
    bytes_accessed = (b_pad * in_pad * itemsize                 # state-action tiles
                      + (in_pad + h_pad + 1) * h_pad * itemsize  # w1, wh, wo
                      + (2 * h_pad + 1) * 4                      # biases (f32)
                      + b_pad * 4)                               # output row

    kernel = functools.partial(qvalue_kernel, num_hidden_repeats=num_repeats)
    resident = lambda a: pl.BlockSpec(a.shape, lambda i: (0,) * a.ndim)

    out_row = pl.pallas_call(
        kernel,
        out_shape=jax.ShapeDtypeStruct((1, b_pad), jnp.float32),
        grid=grid,
        in_specs=[pl.BlockSpec((tb, in_pad), lambda i: (i, 0)),
                  resident(w1), resident(b1),
                  resident(wh), resident(bh),
                  resident(wo), resident(bo)],
        out_specs=pl.BlockSpec((1, tb), lambda i: (0, i)),
        compiler_params=pltpu.CompilerParams(
            dimension_semantics=("parallel",)),
        cost_estimate=pl.CostEstimate(flops=flops, transcendentals=0,
                                      bytes_accessed=bytes_accessed),
    )(x, w1, b1, wh, bh, wo, bo)

    return out_row[0, :B].reshape(B, 1).astype(jnp.float32)


def init_params(key, obs_dim, action_dim, hidden_size):
    """PyTorch-style uniform(-1/sqrt(fan_in), 1/sqrt(fan_in)) init; W stored as (in, out)."""
    in_dim = obs_dim + action_dim
    ks = jax.random.split(key, 6)

    def u(k, shape, fan_in):
        bound = 1.0 / jnp.sqrt(jnp.float32(fan_in))
        return jax.random.uniform(k, shape, jnp.float32, -bound, bound)

    return {
        "w1": u(ks[0], (in_dim, hidden_size), in_dim),
        "b1": u(ks[1], (1, hidden_size), in_dim),
        "wh": u(ks[2], (hidden_size, hidden_size), hidden_size),
        "bh": u(ks[3], (1, hidden_size), hidden_size),
        "wo": u(ks[4], (hidden_size, 1), hidden_size),
        "bo": u(ks[5], (1, 1), hidden_size),
    }


def qvalue_reference(state, action, params, *, layer_size):
    h = jnp.concatenate([state, action], axis=-1) @ params["w1"] + params["b1"]
    for _ in range(layer_size - 1):
        h = jnp.maximum(h, 0.0) @ params["wh"] + params["bh"]
    return h @ params["wo"] + params["bo"]


if __name__ == "__main__":
    obs_dim, action_dim, layer_size, hidden_size = 24, 8, 3, 32
    batch = 8

    key = jax.random.PRNGKey(0)
    k_params, k_state, k_action = jax.random.split(key, 3)
    params = init_params(k_params, obs_dim, action_dim, hidden_size)
    state = jax.random.normal(k_state, (batch, obs_dim), jnp.float32)
    action = jax.random.normal(k_action, (batch, action_dim), jnp.float32)

    out = qvalue_forward(state, action, params, layer_size=layer_size)
    out = jax.block_until_ready(out)

    ref = qvalue_reference(state, action, params, layer_size=layer_size)
    assert out.shape == (batch, 1)
    assert jnp.allclose(out, ref, atol=1e-4, rtol=1e-4)

    print("KERNEL_OK")
</pallas_src>

<mosaic_0001>
module attributes {stable_mosaic.version = 11 : i64} {
  func.func @qvalue_kernel(%arg0: i32, %arg1: memref<8x128xf32, #tpu.memory_space<vmem>>, %arg2: memref<128x128xf32, #tpu.memory_space<vmem>>, %arg3: memref<1x128xf32, #tpu.memory_space<vmem>>, %arg4: memref<128x128xf32, #tpu.memory_space<vmem>>, %arg5: memref<1x128xf32, #tpu.memory_space<vmem>>, %arg6: memref<1x128xf32, #tpu.memory_space<vmem>>, %arg7: memref<1x1xf32, #tpu.memory_space<vmem>>, %arg8: memref<1x8xf32, #tpu.memory_space<vmem>>) attributes {dimension_semantics = [#tpu.dimension_semantics<parallel>], iteration_bounds = array<i64: 1>, scalar_prefetch = 0 : i64, scratch_operands = 0 : i64, tpu.core_type = #tpu.core_type<tc>, window_params = [{transform_indices = @transform_0, window_bounds = array<i64: 8, 128>}, {pipeline_mode = #tpu.pipeline_mode<synchronous>, transform_indices = @transform_1, window_bounds = array<i64: 128, 128>}, {pipeline_mode = #tpu.pipeline_mode<synchronous>, transform_indices = @transform_2, window_bounds = array<i64: 1, 128>}, {pipeline_mode = #tpu.pipeline_mode<synchronous>, transform_indices = @transform_3, window_bounds = array<i64: 128, 128>}, {pipeline_mode = #tpu.pipeline_mode<synchronous>, transform_indices = @transform_4, window_bounds = array<i64: 1, 128>}, {pipeline_mode = #tpu.pipeline_mode<synchronous>, transform_indices = @transform_5, window_bounds = array<i64: 1, 128>}, {pipeline_mode = #tpu.pipeline_mode<synchronous>, transform_indices = @transform_6, window_bounds = array<i64: 1, 1>}, {transform_indices = @transform_7, window_bounds = array<i64: 1, 8>}]} {
    %c0 = arith.constant 0 : index
    %c0_0 = arith.constant 0 : index
    %0 = vector.load %arg1[%c0, %c0_0] : memref<8x128xf32, #tpu.memory_space<vmem>>, vector<8x128xf32>
    %c0_1 = arith.constant 0 : index
    %c0_2 = arith.constant 0 : index
    %1 = vector.load %arg2[%c0_1, %c0_2] : memref<128x128xf32, #tpu.memory_space<vmem>>, vector<128x128xf32>
    %cst = arith.constant dense<0.000000e+00> : vector<8x128xf32>
    %2 = tpu.matmul %0, %1, %cst {dimension_numbers = #tpu.dot_dimension_numbers<[1], [0], [0], [1], [0, 0, 1, 1], [], []>} : vector<8x128xf32>, vector<128x128xf32>, vector<8x128xf32> -> vector<8x128xf32>
    %c0_3 = arith.constant 0 : index
    %c0_4 = arith.constant 0 : index
    %3 = vector.load %arg3[%c0_3, %c0_4] : memref<1x128xf32, #tpu.memory_space<vmem>>, vector<1x128xf32>
    %4 = vector.broadcast %3 : vector<1x128xf32> to vector<8x128xf32>
    %5 = arith.addf %2, %4 : vector<8x128xf32>
    %c0_5 = arith.constant 0 : index
    %c0_6 = arith.constant 0 : index
    %6 = vector.load %arg4[%c0_5, %c0_6] : memref<128x128xf32, #tpu.memory_space<vmem>>, vector<128x128xf32>
    %c0_7 = arith.constant 0 : index
    %c0_8 = arith.constant 0 : index
    %7 = vector.load %arg5[%c0_7, %c0_8] : memref<1x128xf32, #tpu.memory_space<vmem>>, vector<1x128xf32>
    %c0_i32 = arith.constant 0 : i32
    %cst_9 = arith.constant 0.000000e+00 : f32
    %8 = vector.broadcast %cst_9 : f32 to vector<8x128xf32>
    %9 = arith.maximumf %5, %8 : vector<8x128xf32>
    %cst_10 = arith.constant dense<0.000000e+00> : vector<8x128xf32>
    %10 = tpu.matmul %9, %6, %cst_10 {dimension_numbers = #tpu.dot_dimension_numbers<[1], [0], [0], [1], [0, 0, 1, 1], [], []>} : vector<8x128xf32>, vector<128x128xf32>, vector<8x128xf32> -> vector<8x128xf32>
    %11 = vector.broadcast %7 : vector<1x128xf32> to vector<8x128xf32>
    %12 = arith.addf %10, %11 : vector<8x128xf32>
    %c1_i32 = arith.constant 1 : i32
    %cst_11 = arith.constant 0.000000e+00 : f32
    %13 = vector.broadcast %cst_11 : f32 to vector<8x128xf32>
    %14 = arith.maximumf %12, %13 : vector<8x128xf32>
    %cst_12 = arith.constant dense<0.000000e+00> : vector<8x128xf32>
    %15 = tpu.matmul %14, %6, %cst_12 {dimension_numbers = #tpu.dot_dimension_numbers<[1], [0], [0], [1], [0, 0, 1, 1], [], []>} : vector<8x128xf32>, vector<128x128xf32>, vector<8x128xf32> -> vector<8x128xf32>
    %16 = vector.broadcast %7 : vector<1x128xf32> to vector<8x128xf32>
    %17 = arith.addf %15, %16 : vector<8x128xf32>
    %c0_13 = arith.constant 0 : index
    %c0_14 = arith.constant 0 : index
    %18 = vector.load %arg6[%c0_13, %c0_14] : memref<1x128xf32, #tpu.memory_space<vmem>>, vector<1x128xf32>
    %cst_15 = arith.constant dense<0.000000e+00> : vector<1x8xf32>
    %19 = tpu.matmul %18, %17, %cst_15 {dimension_numbers = #tpu.dot_dimension_numbers<[1], [1], [0], [0], [0, 0, 1, 0], [], []>} : vector<1x128xf32>, vector<8x128xf32>, vector<1x8xf32> -> vector<1x8xf32>
    %c0_16 = arith.constant 0 : index
    %c0_17 = arith.constant 0 : index
    %20 = vector.load %arg7[%c0_16, %c0_17] : memref<1x1xf32, #tpu.memory_space<vmem>>, vector<1x1xf32>
    %21 = vector.broadcast %20 : vector<1x1xf32> to vector<1x8xf32>
    %22 = arith.addf %19, %21 : vector<1x8xf32>
    %c0_18 = arith.constant 0 : index
    %c0_19 = arith.constant 0 : index
    %23 = vector.load %arg8[%c0_18, %c0_19] : memref<1x8xf32, #tpu.memory_space<vmem>>, vector<1x8xf32>
    tpu.vector_store %arg8[%c0_18, %c0_19], %22 {strides = array<i32>} : memref<1x8xf32, #tpu.memory_space<vmem>>, vector<1x8xf32>,
    return
  }
  func.func @transform_0(%arg0: i32) -> (i32, i32) {
    %c0_i32 = arith.constant 0 : i32
    %c0_i32_0 = arith.constant 0 : i32
    return %arg0, %c0_i32 : i32, i32
  }
  func.func @transform_1(%arg0: i32) -> (i32, i32) {
    %c0_i32 = arith.constant 0 : i32
    %c0_i32_0 = arith.constant 0 : i32
    %c0_i32_1 = arith.constant 0 : i32
    return %c0_i32, %c0_i32_0 : i32, i32
  }
  func.func @transform_2(%arg0: i32) -> (i32, i32) {
    %c0_i32 = arith.constant 0 : i32
    %c0_i32_0 = arith.constant 0 : i32
    %c0_i32_1 = arith.constant 0 : i32
    return %c0_i32, %c0_i32_0 : i32, i32
  }
  func.func @transform_3(%arg0: i32) -> (i32, i32) {
    %c0_i32 = arith.constant 0 : i32
    %c0_i32_0 = arith.constant 0 : i32
    %c0_i32_1 = arith.constant 0 : i32
    return %c0_i32, %c0_i32_0 : i32, i32
  }
  func.func @transform_4(%arg0: i32) -> (i32, i32) {
    %c0_i32 = arith.constant 0 : i32
    %c0_i32_0 = arith.constant 0 : i32
    %c0_i32_1 = arith.constant 0 : i32
    return %c0_i32, %c0_i32_0 : i32, i32
  }
  func.func @transform_5(%arg0: i32) -> (i32, i32) {
    %c0_i32 = arith.constant 0 : i32
    %c0_i32_0 = arith.constant 0 : i32
    %c0_i32_1 = arith.constant 0 : i32
    return %c0_i32, %c0_i32_0 : i32, i32
  }
  func.func @transform_6(%arg0: i32) -> (i32, i32) {
    %c0_i32 = arith.constant 0 : i32
    %c0_i32_0 = arith.constant 0 : i32
    %c0_i32_1 = arith.constant 0 : i32
    return %c0_i32, %c0_i32_0 : i32, i32
  }
  func.func @transform_7(%arg0: i32) -> (i32, i32) {
    %c0_i32 = arith.constant 0 : i32
    %c0_i32_0 = arith.constant 0 : i32
    return %c0_i32, %arg0 : i32, i32
  }
}

</mosaic_0001>

<llo_original>
// kernel: tpu_custom_call.1
$region0: #{tpu_custom_call.1}
  #allocation0 [shape = 'u32[]', space=smem, size = 0x4, offset = 0x4, fixed_abs, tag = 'smem constant byte address 0x4 - core index']
  #allocation1 [shape = 'u32[144,128]{1,0:T(1,128)}', space=vmem, size = 0x12000, scoped, tag = 'internal scratch']
  #allocation2 [shape = 'f32[1,1]{1,0:T(1,128)S(1)}', space=vmem, size = 0x200, scoped, tag = 'scoped memory for tpu_custom_call.1']
  %s0 = inlined_call_operand.hbm [shape: f32[8,128], index: 0, kind: input, shape index: {}]
  %s1 = inlined_call_operand.hbm [shape: f32[128,128], index: 1, kind: input, shape index: {}]
  %s2 = inlined_call_operand.vmem [shape: f32[1,128], index: 2, kind: input, shape index: {}]
  %s3 = inlined_call_operand.hbm [shape: f32[128,128], index: 3, kind: input, shape index: {}]
  %s4 = inlined_call_operand.vmem [shape: f32[1,128], index: 4, kind: input, shape index: {}]
  %s5 = inlined_call_operand.vmem [shape: f32[1,128], index: 5, kind: input, shape index: {}]
  %s6 = inlined_call_operand.<no memory space> [shape: f32[1,1], index: 6, kind: input, shape index: {}]
  %s7 = inlined_call_operand.hbm [shape: f32[1,8], index: 7, kind: output, shape index: {}]
  %s8 = sld [smem:[#allocation0]]
  $region50: #{tpu_custom_call.1} parent=0
    _
  %s10 = ssub.s32 1, %s8
  %s11 = scalar_select 0, %s10, %s8
  %v12 = vstv %s6
  %13 = vst [vmem:[#allocation2] sm:$0x1] %v12
  $region1: #{tpu_custom_call.1} parent=0
    #allocation3 [shape = 'u8[4096]{0}', space=vmem, size = 0x1000, scoped, tag = 'input window, operand 0, single buffered']
    #allocation4 [shape = 's32[1]{0}', space=sflag, size = 0x4, scoped, tag = 'scoped memory for tpu_custom_call.1']
    #allocation5 [shape = 's32[1]{0}', space=sflag, size = 0x4, scoped, tag = 'scoped memory for tpu_custom_call.1']
    #allocation6 [shape = 'u8[65536]{0}', space=vmem, size = 0x10000, scoped, tag = 'input window, operand 1, single buffered']
    #allocation7 [shape = 's32[1]{0}', space=sflag, size = 0x4, scoped, tag = 'scoped memory for tpu_custom_call.1']
    #allocation8 [shape = 'u8[65536]{0}', space=vmem, size = 0x10000, scoped, tag = 'input window, operand 3, single buffered']
    #allocation9 [shape = 'u8[512]{0}', space=vmem, size = 0x400, scoped, tag = 'output window, operand 0, single buffered']
    %14 = vsyncpa [#allocation4], 0
    %15 = vsyncpa [#allocation7], 0
    %16 = vsyncpa [#allocation5], 0
    // Predicated region
    $region2: #{tpu_custom_call.1} parent=1 // pred_check
      _
    $region3: #{tpu_custom_call.1} parent=1 // pred_check_branch
      %18 = sbr.rel (0) target = $region5
    $region4: #{tpu_custom_call.1} parent=1 // pred_region
      %s20 = ssub.s32 128, 128
      %21 = vsyncadd [#allocation4], %s20
      %s23 = sshll.u32 [#allocation3], 4
      %s24 = int_to_ptr.vmem [resolvable:$true] %s23
      %26 = dma.hbm_to_vmem [thread:$0]  %s0, 128, %s24, [#allocation4]
    $region5: #{tpu_custom_call.1} parent=1 // pred_fallthru
      _
    // Predicated region
    $region6: #{tpu_custom_call.1} parent=1 // pred_check
      _
    $region7: #{tpu_custom_call.1} parent=1 // pred_check_branch
      %28 = sbr.rel (0) target = $region9
    $region8: #{tpu_custom_call.1} parent=1 // pred_region
      %s30 = ssub.s32 2048, 2048
      %31 = vsyncadd [#allocation7], %s30
      %s32 = sshll.u32 [#allocation6], 4
      %s33 = int_to_ptr.vmem [resolvable:$true] %s32
      %38 = dma.hbm_to_vmem [thread:$0]  %s1, 2048, %s33, [#allocation7], 128, 128, 8
    $region9: #{tpu_custom_call.1} parent=1 // pred_fallthru
      _
    // Predicated region
    $region10: #{tpu_custom_call.1} parent=1 // pred_check
      _
    $region11: #{tpu_custom_call.1} parent=1 // pred_check_branch
      %40 = sbr.rel (0) target = $region13
    $region12: #{tpu_custom_call.1} parent=1 // pred_region
      _
    $region13: #{tpu_custom_call.1} parent=1 // pred_fallthru
      _
    // Predicated region
    $region14: #{tpu_custom_call.1} parent=1 // pred_check
      _
    $region15: #{tpu_custom_call.1} parent=1 // pred_check_branch
      %42 = sbr.rel (0) target = $region17
    $region16: #{tpu_custom_call.1} parent=1 // pred_region
      %s44 = ssub.s32 2048, 2048
      %45 = vsyncadd [#allocation7], %s44
      %s46 = sshll.u32 [#allocation8], 4
      %s47 = int_to_ptr.vmem [resolvable:$true] %s46
      %52 = dma.hbm_to_vmem [thread:$0]  %s3, 2048, %s47, [#allocation7], 128, 128, 8
    $region17: #{tpu_custom_call.1} parent=1 // pred_fallthru
      _
    // Predicated region
    $region18: #{tpu_custom_call.1} parent=1 // pred_check
      _
    $region19: #{tpu_custom_call.1} parent=1 // pred_check_branch
      %54 = sbr.rel (0) target = $region21
    $region20: #{tpu_custom_call.1} parent=1 // pred_region
      _
    $region21: #{tpu_custom_call.1} parent=1 // pred_fallthru
      _
    // Predicated region
    $region22: #{tpu_custom_call.1} parent=1 // pred_check
      _
    $region23: #{tpu_custom_call.1} parent=1 // pred_check_branch
      %56 = sbr.rel (0) target = $region25
    $region24: #{tpu_custom_call.1} parent=1 // pred_region
      _
    $region25: #{tpu_custom_call.1} parent=1 // pred_fallthru
      _
    // Predicated region
    $region26: #{tpu_custom_call.1} parent=1 // pred_check
      _
    $region27: #{tpu_custom_call.1} parent=1 // pred_check_branch
      %58 = sbr.rel (0) target = $region29
    $region28: #{tpu_custom_call.1} parent=1 // pred_region
      _
    $region29: #{tpu_custom_call.1} parent=1 // pred_fallthru
      _
    // Predicated region
    $region30: #{tpu_custom_call.1} parent=1 // pred_check
      _
    $region31: #{tpu_custom_call.1} parent=1 // pred_check_branch
      %60 = sbr.rel (0) target = $region33
    $region32: #{tpu_custom_call.1} parent=1 // pred_region
      %61 = dma.done [#allocation4], 128
    $region33: #{tpu_custom_call.1} parent=1 // pred_fallthru
      _
    // Predicated region
    $region34: #{tpu_custom_call.1} parent=1 // pred_check
      _
    $region35: #{tpu_custom_call.1} parent=1 // pred_check_branch
      %63 = sbr.rel (0) target = $region37
    $region36: #{tpu_custom_call.1} parent=1 // pred_region
      %64 = dma.done [#allocation7], 2048
    $region37: #{tpu_custom_call.1} parent=1 // pred_fallthru
      _
    // Predicated region
    $region38: #{tpu_custom_call.1} parent=1 // pred_check
      _
    $region39: #{tpu_custom_call.1} parent=1 // pred_check_branch
      %66 = sbr.rel (0) target = $region41
    $region40: #{tpu_custom_call.1} parent=1 // pred_region
      %67 = dma.done [#allocation7], 2048
    $region41: #{tpu_custom_call.1} parent=1 // pred_fallthru
      _
    %v68 = vld [vmem:[#allocation3] sm:$0xff]
    %v69 = vld [vmem:[#allocation6] sm:$0xff]
    %v70 = vld [vmem:[#allocation6 + $0x8] sm:$0xff]
    %v71 = vld [vmem:[#allocation6 + $0x10] sm:$0xff]
    %v72 = vld [vmem:[#allocation6 + $0x18] sm:$0xff]
    %v73 = vld [vmem:[#allocation6 + $0x20] sm:$0xff]
    %v74 = vld [vmem:[#allocation6 + $0x28] sm:$0xff]
    %v75 = vld [vmem:[#allocation6 + $0x30] sm:$0xff]
    %v76 = vld [vmem:[#allocation6 + $0x38] sm:$0xff]
    %v77 = vld [vmem:[#allocation6 + $0x40] sm:$0xff]
    %v78 = vld [vmem:[#allocation6 + $0x48] sm:$0xff]
    %v79 = vld [vmem:[#allocation6 + $0x50] sm:$0xff]
    %v80 = vld [vmem:[#allocation6 + $0x58] sm:$0xff]
    %v81 = vld [vmem:[#allocation6 + $0x60] sm:$0xff]
    %v82 = vld [vmem:[#allocation6 + $0x68] sm:$0xff]
    %v83 = vld [vmem:[#allocation6 + $0x70] sm:$0xff]
    %v84 = vld [vmem:[#allocation6 + $0x78] sm:$0xff]
    %v85 = vld [vmem:[%s2] sm:$0x1]
    %v87 = vlaneseq
    %v88 = vshrl.u32 %v87, 7
    %v89 = vsub.s32 0, %v88
    %v90 = vrot.slane %v85, %v89
    %92 = vmatprep.subr.mxu0 0.0
    %93 = vmatpush1.msra.mxu0 %v69
    %94 = vmatprep.subr.mxu0 0.0
    %95 = vmatpush1.msra.mxu0 %v70
    %96 = vmatprep.subr.mxu0 0.0
    %97 = vmatpush1.msra.mxu0 %v71
    %98 = vmatprep.subr.mxu0 0.0
    %99 = vmatpush1.msra.mxu0 %v72
    %100 = vmatprep.subr.mxu0 0.0
    %101 = vmatpush1.msra.mxu0 %v73
    %102 = vmatprep.subr.mxu0 0.0
    %103 = vmatpush1.msra.mxu0 %v74
    %104 = vmatprep.subr.mxu0 0.0
    %105 = vmatpush1.msra.mxu0 %v75
    %106 = vmatprep.subr.mxu0 0.0
    %107 = vmatpush1.msra.mxu0 %v76
    %108 = vmatprep.subr.mxu0 0.0
    %109 = vmatpush1.msra.mxu0 %v77
    %110 = vmatprep.subr.mxu0 0.0
    %111 = vmatpush1.msra.mxu0 %v78
    %112 = vmatprep.subr.mxu0 0.0
    %113 = vmatpush1.msra.mxu0 %v79
    %114 = vmatprep.subr.mxu0 0.0
    %115 = vmatpush1.msra.mxu0 %v80
    %116 = vmatprep.subr.mxu0 0.0
    %117 = vmatpush1.msra.mxu0 %v81
    %118 = vmatprep.subr.mxu0 0.0
    %119 = vmatpush1.msra.mxu0 %v82
    %120 = vmatprep.subr.mxu0 0.0
    %121 = vmatpush1.msra.mxu0 %v83
    %122 = vmatprep.subr.mxu0 0.0
    %123 = vmatpush1.msra.mxu0 %v84
    %124 = vmatprep.subr.mxu0 0.0
    %125 = vmatpush1.msra.mxu0 0.0
    %126 = vmatprep.subr.mxu0 0.0
    %127 = vmatpush1.msra.mxu0 0.0
    %128 = vmatprep.subr.mxu0 0.0
    %129 = vmatpush1.msra.mxu0 0.0
    %130 = vmatprep.subr.mxu0 0.0
    %131 = vmatpush1.msra.mxu0 0.0
    %132 = vmatprep.subr.mxu0 0.0
    %133 = vmatpush1.msra.mxu0 0.0
    %134 = vmatprep.subr.mxu0 0.0
    %135 = vmatpush1.msra.mxu0 0.0
    %136 = vmatprep.subr.mxu0 0.0
    %137 = vmatpush1.msra.mxu0 0.0
    %138 = vmatprep.subr.mxu0 0.0
    %139 = vmatpush1.msra.mxu0 0.0
    %140 = vmatprep.subr.mxu0 0.0
    %141 = vmatpush1.msra.mxu0 0.0
    %142 = vmatprep.subr.mxu0 0.0
    %143 = vmatpush1.msra.mxu0 0.0
    %144 = vmatprep.subr.mxu0 0.0
    %145 = vmatpush1.msra.mxu0 0.0
    %146 = vmatprep.subr.mxu0 0.0
    %147 = vmatpush1.msra.mxu0 0.0
    %148 = vmatprep.subr.mxu0 0.0
    %149 = vmatpush1.msra.mxu0 0.0
    %150 = vmatprep.subr.mxu0 0.0
    %151 = vmatpush1.msra.mxu0 0.0
    %152 = vmatprep.subr.mxu0 0.0
    %153 = vmatpush1.msra.mxu0 0.0
    %154 = vmatprep.subr.mxu0 0.0
    %155 = vmatpush1.msra.mxu0 0.0
    %156 = vmatprep.mubr.f32.mxu0 0.0
    %157 = vmatmul.mubr.f32.gmra.mrb[0].mxu0 %v68
    %v158 = vpop.f32.mrb[0].mxu0
    %v159 = vadd.f32 %v90, %v158
    %v160 = vpop.f32.mrb[0].mxu0
    %161 = vdwg.mxu0
    %v162 = vld [vmem:[#allocation8] sm:$0xff]
    %v163 = vld [vmem:[#allocation8 + $0x8] sm:$0xff]
    %v164 = vld [vmem:[#allocation8 + $0x10] sm:$0xff]
    %v165 = vld [vmem:[#allocation8 + $0x18] sm:$0xff]
    %v166 = vld [vmem:[#allocation8 + $0x20] sm:$0xff]
    %v167 = vld [vmem:[#allocation8 + $0x28] sm:$0xff]
    %v168 = vld [vmem:[#allocation8 + $0x30] sm:$0xff]
    %v169 = vld [vmem:[#allocation8 + $0x38] sm:$0xff]
    %v170 = vld [vmem:[#allocation8 + $0x40] sm:$0xff]
    %v171 = vld [vmem:[#allocation8 + $0x48] sm:$0xff]
    %v172 = vld [vmem:[#allocation8 + $0x50] sm:$0xff]
    %v173 = vld [vmem:[#allocation8 + $0x58] sm:$0xff]
    %v174 = vld [vmem:[#allocation8 + $0x60] sm:$0xff]
    %v175 = vld [vmem:[#allocation8 + $0x68] sm:$0xff]
    %v176 = vld [vmem:[#allocation8 + $0x70] sm:$0xff]
    %v177 = vld [vmem:[#allocation8 + $0x78] sm:$0xff]
    %v178 = vld [vmem:[%s4] sm:$0x1]
    %v179 = vmax.f32 %v159, 0.0
    %v181 = vlaneseq
    %v182 = vshrl.u32 %v181, 7
    %v183 = vsub.s32 0, %v182
    %v184 = vrot.slane %v178, %v183
    %186 = vmatprep.subr.mxu0 0.0
    %187 = vmatpush1.msra.mxu0 %v162
    %188 = vmatprep.subr.mxu0 0.0
    %189 = vmatpush1.msra.mxu0 %v163
    %190 = vmatprep.subr.mxu0 0.0
    %191 = vmatpush1.msra.mxu0 %v164
    %192 = vmatprep.subr.mxu0 0.0
    %193 = vmatpush1.msra.mxu0 %v165
    %194 = vmatprep.subr.mxu0 0.0
    %195 = vmatpush1.msra.mxu0 %v166
    %196 = vmatprep.subr.mxu0 0.0
    %197 = vmatpush1.msra.mxu0 %v167
    %198 = vmatprep.subr.mxu0 0.0
    %199 = vmatpush1.msra.mxu0 %v168
    %200 = vmatprep.subr.mxu0 0.0
    %201 = vmatpush1.msra.mxu0 %v169
    %202 = vmatprep.subr.mxu0 0.0
    %203 = vmatpush1.msra.mxu0 %v170
    %204 = vmatprep.subr.mxu0 0.0
    %205 = vmatpush1.msra.mxu0 %v171
    %206 = vmatprep.subr.mxu0 0.0
    %207 = vmatpush1.msra.mxu0 %v172
    %208 = vmatprep.subr.mxu0 0.0
    %209 = vmatpush1.msra.mxu0 %v173
    %210 = vmatprep.subr.mxu0 0.0
    %211 = vmatpush1.msra.mxu0 %v174
    %212 = vmatprep.subr.mxu0 0.0
    %213 = vmatpush1.msra.mxu0 %v175
    %214 = vmatprep.subr.mxu0 0.0
    %215 = vmatpush1.msra.mxu0 %v176
    %216 = vmatprep.subr.mxu0 0.0
    %217 = vmatpush1.msra.mxu0 %v177
    %218 = vmatprep.subr.mxu0 0.0
    %219 = vmatpush1.msra.mxu0 0.0
    %220 = vmatprep.subr.mxu0 0.0
    %221 = vmatpush1.msra.mxu0 0.0
    %222 = vmatprep.subr.mxu0 0.0
    %223 = vmatpush1.msra.mxu0 0.0
    %224 = vmatprep.subr.mxu0 0.0
    %225 = vmatpush1.msra.mxu0 0.0
    %226 = vmatprep.subr.mxu0 0.0
    %227 = vmatpush1.msra.mxu0 0.0
    %228 = vmatprep.subr.mxu0 0.0
    %229 = vmatpush1.msra.mxu0 0.0
    %230 = vmatprep.subr.mxu0 0.0
    %231 = vmatpush1.msra.mxu0 0.0
    %232 = vmatprep.subr.mxu0 0.0
    %233 = vmatpush1.msra.mxu0 0.0
    %234 = vmatprep.subr.mxu0 0.0
    %235 = vmatpush1.msra.mxu0 0.0
    %236 = vmatprep.subr.mxu0 0.0
    %237 = vmatpush1.msra.mxu0 0.0
    %238 = vmatprep.subr.mxu0 0.0
    %239 = vmatpush1.msra.mxu0 0.0
    %240 = vmatprep.subr.mxu0 0.0
    %241 = vmatpush1.msra.mxu0 0.0
    %242 = vmatprep.subr.mxu0 0.0
    %243 = vmatpush1.msra.mxu0 0.0
    %244 = vmatprep.subr.mxu0 0.0
    %245 = vmatpush1.msra.mxu0 0.0
    %246 = vmatprep.subr.mxu0 0.0
    %247 = vmatpush1.msra.mxu0 0.0
    %248 = vmatprep.subr.mxu0 0.0
    %249 = vmatpush1.msra.mxu0 0.0
    %250 = vmatprep.mubr.f32.mxu0 0.0
    %251 = vmatmul.mubr.f32.gmra.mrb[0].mxu0 %v179
    %v252 = vpop.f32.mrb[0].mxu0
    %v253 = vadd.f32 %v184, %v252
    %v254 = vpop.f32.mrb[0].mxu0
    %255 = vdwg.mxu0
    %v256 = vmax.f32 %v253, 0.0
    %257 = vmatprep.subr.mxu0 0.0
    %258 = vmatpush1.msra.mxu0 %v162
    %259 = vmatprep.subr.mxu0 0.0
    %260 = vmatpush1.msra.mxu0 %v163
    %261 = vmatprep.subr.mxu0 0.0
    %262 = vmatpush1.msra.mxu0 %v164
    %263 = vmatprep.subr.mxu0 0.0
    %264 = vmatpush1.msra.mxu0 %v165
    %265 = vmatprep.subr.mxu0 0.0
    %266 = vmatpush1.msra.mxu0 %v166
    %267 = vmatprep.subr.mxu0 0.0
    %268 = vmatpush1.msra.mxu0 %v167
    %269 = vmatprep.subr.mxu0 0.0
    %270 = vmatpush1.msra.mxu0 %v168
    %271 = vmatprep.subr.mxu0 0.0
    %272 = vmatpush1.msra.mxu0 %v169
    %273 = vmatprep.subr.mxu0 0.0
    %274 = vmatpush1.msra.mxu0 %v170
    %275 = vmatprep.subr.mxu0 0.0
    %276 = vmatpush1.msra.mxu0 %v171
    %277 = vmatprep.subr.mxu0 0.0
    %278 = vmatpush1.msra.mxu0 %v172
    %279 = vmatprep.subr.mxu0 0.0
    %280 = vmatpush1.msra.mxu0 %v173
    %281 = vmatprep.subr.mxu0 0.0
    %282 = vmatpush1.msra.mxu0 %v174
    %283 = vmatprep.subr.mxu0 0.0
    %284 = vmatpush1.msra.mxu0 %v175
    %285 = vmatprep.subr.mxu0 0.0
    %286 = vmatpush1.msra.mxu0 %v176
    %287 = vmatprep.subr.mxu0 0.0
    %288 = vmatpush1.msra.mxu0 %v177
    %289 = vmatprep.subr.mxu0 0.0
    %290 = vmatpush1.msra.mxu0 0.0
    %291 = vmatprep.subr.mxu0 0.0
    %292 = vmatpush1.msra.mxu0 0.0
    %293 = vmatprep.subr.mxu0 0.0
    %294 = vmatpush1.msra.mxu0 0.0
    %295 = vmatprep.subr.mxu0 0.0
    %296 = vmatpush1.msra.mxu0 0.0
    %297 = vmatprep.subr.mxu0 0.0
    %298 = vmatpush1.msra.mxu0 0.0
    %299 = vmatprep.subr.mxu0 0.0
    %300 = vmatpush1.msra.mxu0 0.0
    %301 = vmatprep.subr.mxu0 0.0
    %302 = vmatpush1.msra.mxu0 0.0
    %303 = vmatprep.subr.mxu0 0.0
    %304 = vmatpush1.msra.mxu0 0.0
    %305 = vmatprep.subr.mxu0 0.0
    %306 = vmatpush1.msra.mxu0 0.0
    %307 = vmatprep.subr.mxu0 0.0
    %308 = vmatpush1.msra.mxu0 0.0
    %309 = vmatprep.subr.mxu0 0.0
    %310 = vmatpush1.msra.mxu0 0.0
    %311 = vmatprep.subr.mxu0 0.0
    %312 = vmatpush1.msra.mxu0 0.0
    %313 = vmatprep.subr.mxu0 0.0
    %314 = vmatpush1.msra.mxu0 0.0
    %315 = vmatprep.subr.mxu0 0.0
    %316 = vmatpush1.msra.mxu0 0.0
    %317 = vmatprep.subr.mxu0 0.0
    %318 = vmatpush1.msra.mxu0 0.0
    %319 = vmatprep.subr.mxu0 0.0
    %320 = vmatpush1.msra.mxu0 0.0
    %321 = vmatprep.mubr.f32.mxu0 0.0
    %322 = vmatmul.mubr.f32.gmra.mrb[0].mxu0 %v256
    %v323 = vpop.f32.mrb[0].mxu0
    %v324 = vadd.f32 %v184, %v323
    %v325 = vpop.f32.mrb[0].mxu0
    %326 = vdwg.mxu0
    %v327 = vld [vmem:[%s5] sm:$0x1]
    %v328 = vld [vmem:[#allocation2] sm:$0x1]
    %330 = vset.pattern.permute.xlu0 0
    %331 = vperm.xlu0 %330, %v328
    %v332 = vpop.permute.xlu0 %331
    %v334 = vlaneseq
    %v335 = vshrl.u32 %v334, 7
    %v336 = vsub.s32 0, %v335
    %v337 = vrot.slane %v332, %v336
    %338 = vmatprep.subr.mxu0 0.0
    %339 = vmatpush1.xpose.msra.mxu0 %v324
    %340 = vmatprep.subr.mxu0 0.0
    %341 = vmatpush1.xpose.msra.mxu0 0.0
    %342 = vmatprep.subr.mxu0 0.0
    %343 = vmatpush1.xpose.msra.mxu0 0.0
    %344 = vmatprep.subr.mxu0 0.0
    %345 = vmatpush1.xpose.msra.mxu0 0.0
    %346 = vmatprep.subr.mxu0 0.0
    %347 = vmatpush1.xpose.msra.mxu0 0.0
    %348 = vmatprep.subr.mxu0 0.0
    %349 = vmatpush1.xpose.msra.mxu0 0.0
    %350 = vmatprep.subr.mxu0 0.0
    %351 = vmatpush1.xpose.msra.mxu0 0.0
    %352 = vmatprep.subr.mxu0 0.0
    %353 = vmatpush1.xpose.msra.mxu0 0.0
    %354 = vmatprep.subr.mxu0 0.0
    %355 = vmatpush1.xpose.msra.mxu0 0.0
    %356 = vmatprep.subr.mxu0 0.0
    %357 = vmatpush1.xpose.msra.mxu0 0.0
    %358 = vmatprep.subr.mxu0 0.0
    %359 = vmatpush1.xpose.msra.mxu0 0.0
    %360 = vmatprep.subr.mxu0 0.0
    %361 = vmatpush1.xpose.msra.mxu0 0.0
    %362 = vmatprep.subr.mxu0 0.0
    %363 = vmatpush1.xpose.msra.mxu0 0.0
    %364 = vmatprep.subr.mxu0 0.0
    %365 = vmatpush1.xpose.msra.mxu0 0.0
    %366 = vmatprep.subr.mxu0 0.0
    %367 = vmatpush1.xpose.msra.mxu0 0.0
    %368 = vmatprep.subr.mxu0 0.0
    %369 = vmatpush1.xpose.msra.mxu0 0.0
    %370 = vmatprep.subr.mxu0 0.0
    %371 = vmatpush1.xpose.msra.mxu0 0.0
    %372 = vmatprep.subr.mxu0 0.0
    %373 = vmatpush1.xpose.msra.mxu0 0.0
    %374 = vmatprep.subr.mxu0 0.0
    %375 = vmatpush1.xpose.msra.mxu0 0.0
    %376 = vmatprep.subr.mxu0 0.0
    %377 = vmatpush1.xpose.msra.mxu0 0.0
    %378 = vmatprep.subr.mxu0 0.0
    %379 = vmatpush1.xpose.msra.mxu0 0.0
    %380 = vmatprep.subr.mxu0 0.0
    %381 = vmatpush1.xpose.msra.mxu0 0.0
    %382 = vmatprep.subr.mxu0 0.0
    %383 = vmatpush1.xpose.msra.mxu0 0.0
    %384 = vmatprep.subr.mxu0 0.0
    %385 = vmatpush1.xpose.msra.mxu0 0.0
    %386 = vmatprep.subr.mxu0 0.0
    %387 = vmatpush1.xpose.msra.mxu0 0.0
    %388 = vmatprep.subr.mxu0 0.0
    %389 = vmatpush1.xpose.msra.mxu0 0.0
    %390 = vmatprep.subr.mxu0 0.0
    %391 = vmatpush1.xpose.msra.mxu0 0.0
    %392 = vmatprep.subr.mxu0 0.0
    %393 = vmatpush1.xpose.msra.mxu0 0.0
    %394 = vmatprep.subr.mxu0 0.0
    %395 = vmatpush1.xpose.msra.mxu0 0.0
    %396 = vmatprep.subr.mxu0 0.0
    %397 = vmatpush1.xpose.msra.mxu0 0.0
    %398 = vmatprep.subr.mxu0 0.0
    %399 = vmatpush1.xpose.msra.mxu0 0.0
    %400 = vmatprep.subr.mxu0 0.0
    %401 = vmatpush1.xpose.msra.mxu0 0.0
    %402 = vmatprep.mubr.f32.mxu0 0.0
    %403 = vmatmul.mubr.f32.gmra.mrb[0].mxu0 %v327
    %v404 = vpop.f32.mrb[0].mxu0
    %v405 = vadd.f32 %v337, %v404
    %v406 = vpop.f32.mrb[0].mxu0
    %407 = vdwg.mxu0
    %vm408 = vcmask 57344
    %409 = vst.msk [vmem:[#allocation9] sm:$0x1] %vm408, %v405
    // Predicated region
    $region42: #{tpu_custom_call.1} parent=1 // pred_check
      _
    $region43: #{tpu_custom_call.1} parent=1 // pred_check_branch
      %411 = sbr.rel (0) target = $region45
    $region44: #{tpu_custom_call.1} parent=1 // pred_region
      %s413 = ssub.s32 16, 16
      %414 = vsyncadd [#allocation5], %s413
      %s416 = sshll.u32 [#allocation9], 4
      %s417 = int_to_ptr.vmem [resolvable:$true] %s416
      %419 = dma.vmem_to_hbm [thread:$0]  %s417, 16, %s7, [#allocation5]
    $region45: #{tpu_custom_call.1} parent=1 // pred_fallthru
      _
    // Predicated region
    $region46: #{tpu_custom_call.1} parent=1 // pred_check
      _
    $region47: #{tpu_custom_call.1} parent=1 // pred_check_branch
      %421 = sbr.rel (0) target = $region49
    $region48: #{tpu_custom_call.1} parent=1 // pred_region
      %422 = dma.done [#allocation5], 16
    $region49: #{tpu_custom_call.1} parent=1 // pred_fallthru
      _
    %423 = vsyncpa [#allocation4], 1
    %424 = vsyncpa [#allocation7], 1
    %425 = vsyncpa [#allocation5], 1

</llo_original>
